<compile_context>
chip_gen: v7x
topology: tpu7x:2x2x1
jax: 0.10.0
libtpu: 0.0.40
codegen_flags: <defaults>
</compile_context>

<pallas_src>
import functools

import jax
import jax.numpy as jnp
from jax.experimental import pallas as pl
from jax.experimental.pallas import tpu as pltpu


def _round_up(x, m):
    return (x + m - 1) // m * m


def _sublane_granule(dtype):
    itemsize = jnp.dtype(dtype).itemsize
    if itemsize >= 4:
        return 8
    if itemsize == 2:
        return 16
    return 32


def _vmem_capacity_bytes():
    try:
        return int(pltpu.get_tpu_info().vmem_capacity_bytes)
    except Exception:
        return 64 * 1024 * 1024  # conservative (v7x-sized) fallback


def _rmsnorm_kernel(x_ref, w_ref, o_ref, *, eps):
    # x_ref: (TILE_ROWS, DIM), w_ref: (1, DIM), o_ref: (TILE_ROWS, DIM)
    x = x_ref[...]
    x_f32 = x.astype(jnp.float32)
    inv = jax.lax.rsqrt(jnp.mean(x_f32 * x_f32, axis=-1, keepdims=True) + eps)
    normed = (x_f32 * inv).astype(x.dtype)  # matches .type_as(x)
    # Final multiply in the promoted dtype (matches torch's `normed * weight`).
    o_ref[...] = normed.astype(o_ref.dtype) * w_ref[...].astype(o_ref.dtype)


def _pick_tile_rows(rows, dim, in_itemsize, out_itemsize, granule, vmem_phys):
    # Double-buffered in/out tiles plus single-buffered f32 temporaries
    # (x_f32 and its square) must fit comfortably.  v7x has only 64 MiB of
    # physical VMEM, so budget ~1/3 of it; on v5e/v6e (128 MiB) cap at 32 MiB,
    # which already saturates their HBM bandwidth.
    budget = min(vmem_phys // 3, 32 * 1024 * 1024)
    per_row = 2 * dim * (in_itemsize + out_itemsize) + 8 * dim  # + f32 temps
    tile_rows = max(budget // max(per_row, 1), granule)

    # Keep per-step in+out DMA traffic >= ~4 MiB (per-step overhead ~0.35 us),
    # but keep the grid >= ~8 steps when rows permit so the "parallel" row axis
    # gives both TensorCores on v7x work with >=2 steps each in flight.
    bytes_per_row = dim * (in_itemsize + out_itemsize)
    min_rows_dma = max((4 * 1024 * 1024) // max(bytes_per_row, 1), granule)
    steps_cap = max(rows // 8, min_rows_dma)
    tile_rows = min(tile_rows, steps_cap)

    # Never exceed the (granule-rounded) total row count.
    tile_rows = min(tile_rows, _round_up(rows, granule))
    tile_rows = max((tile_rows // granule) * granule, granule)
    return int(tile_rows)


def rmsnorm(x, weight, eps=1e-6, tile_rows=None):
    """x: (..., dim) array; weight: (dim,) parameter (e.g. float32 ones)."""
    orig_shape = x.shape
    dim = orig_shape[-1]
    rows = 1
    for s in orig_shape[:-1]:
        rows *= s
    x2d = x.reshape(rows, dim)
    w2d = weight.reshape(1, dim)

    # PyTorch promotion of (x-typed normed) * weight.  Pass weight in x.dtype to
    # keep the output (and its HBM write traffic) in x.dtype.
    out_dtype = jnp.promote_types(x.dtype, weight.dtype)

    granule = _sublane_granule(x.dtype)
    vmem_phys = _vmem_capacity_bytes()
    in_itemsize = jnp.dtype(x.dtype).itemsize
    out_itemsize = jnp.dtype(out_dtype).itemsize

    if tile_rows is None:
        tile_rows = _pick_tile_rows(rows, dim, in_itemsize, out_itemsize,
                                    granule, vmem_phys)
    tile_rows = max((int(tile_rows) // granule) * granule, granule)

    # Ragged rows handled by a partial last block (masked stores); no padding.
    grid = (pl.cdiv(rows, tile_rows),)

    # Explicit VMEM budget: double-buffered in/out tiles + single-buffered f32
    # temporaries + weight row + headroom for internal scratch.
    tile_in = tile_rows * dim * in_itemsize
    tile_out = tile_rows * dim * out_itemsize
    f32_tmp = 2 * tile_rows * dim * 4
    w_bytes = dim * jnp.dtype(weight.dtype).itemsize
    vmem_limit = 2 * (tile_in + tile_out) + f32_tmp + 2 * w_bytes + (8 << 20)
    vmem_limit = int(min(vmem_limit, int(vmem_phys * 0.9)))

    kernel = functools.partial(_rmsnorm_kernel, eps=eps)

    out2d = pl.pallas_call(
        kernel,
        out_shape=jax.ShapeDtypeStruct((rows, dim), out_dtype),
        grid_spec=pltpu.PrefetchScalarGridSpec(
            num_scalar_prefetch=0,
            grid=grid,
            in_specs=[
                pl.BlockSpec((tile_rows, dim), lambda i: (i, 0)),
                pl.BlockSpec((1, dim), lambda i: (0, 0)),  # weight stays resident
            ],
            out_specs=pl.BlockSpec((tile_rows, dim), lambda i: (i, 0)),
        ),
        compiler_params=pltpu.CompilerParams(
            dimension_semantics=("parallel",),   # shards row loop across TCs on v7x
            vmem_limit_bytes=vmem_limit,
        ),
    )(x2d, w2d)

    return out2d.reshape(orig_shape[:-1] + (dim,)) if out_dtype == x.dtype \
        else out2d.reshape(orig_shape[:-1] + (dim,))


def rmsnorm_ref(x, weight, eps=1e-6):
    x_f32 = x.astype(jnp.float32)
    normed = x_f32 * jax.lax.rsqrt(
        jnp.mean(x_f32 * x_f32, axis=-1, keepdims=True) + eps)
    return normed.astype(x.dtype) * weight


if __name__ == "__main__":
    key = jax.random.PRNGKey(0)

    # Test 1: small f32 case matching the module defaults (dim=32 < 128 exercises
    # the narrow-lane full-dim block path).
    batch, seq, dim = 2, 8, 32
    x = jax.random.normal(key, (batch, seq, dim), dtype=jnp.float32)
    weight = jnp.ones((dim,), dtype=jnp.float32)  # nn.Parameter(torch.ones(dim))

    out = jax.block_until_ready(rmsnorm(x, weight))
    ref = rmsnorm_ref(x, weight)
    assert out.shape == x.shape
    assert out.dtype == ref.dtype
    assert jnp.allclose(out, ref, atol=1e-5, rtol=1e-5), "f32 mismatch vs reference"

    # Test 2: bf16 activations, ragged row count (partial last block path) and the
    # torch-exact f32 promotion of the final multiply by an f32 weight.
    k2 = jax.random.PRNGKey(1)
    b2, s2, d2 = 2, 100, 256
    x_bf16 = jax.random.normal(k2, (b2, s2, d2), dtype=jnp.float32).astype(jnp.bfloat16)
    w2 = jnp.ones((d2,), dtype=jnp.float32)
    out2 = jax.block_until_ready(rmsnorm(x_bf16, w2))
    ref2 = rmsnorm_ref(x_bf16, w2)
    assert out2.shape == x_bf16.shape
    assert out2.dtype == ref2.dtype
    assert jnp.allclose(out2.astype(jnp.float32), ref2.astype(jnp.float32),
                        atol=1e-2, rtol=1e-2), "bf16 mismatch vs reference"

    # Test 3: same-dtype weight (bf16) fast path — output stays bf16, halving
    # write traffic vs the f32-promoting path.
    w3 = jnp.ones((d2,), dtype=jnp.bfloat16)
    out3 = jax.block_until_ready(rmsnorm(x_bf16, w3))
    ref3 = rmsnorm_ref(x_bf16, w3)
    assert out3.dtype == jnp.bfloat16 and ref3.dtype == jnp.bfloat16
    assert jnp.allclose(out3.astype(jnp.float32), ref3.astype(jnp.float32),
                        atol=1e-2, rtol=1e-2), "bf16-weight mismatch vs reference"

    print("KERNEL_OK")
</pallas_src>

<mosaic_0001>
module attributes {stable_mosaic.version = 11 : i64} {
  func.func @_rmsnorm_kernel(%arg0: i32, %arg1: memref<16x32xf32, #tpu.memory_space<vmem>>, %arg2: memref<1x32xf32, #tpu.memory_space<vmem>>, %arg3: memref<16x32xf32, #tpu.memory_space<vmem>>) attributes {dimension_semantics = [#tpu.dimension_semantics<parallel>], iteration_bounds = array<i64: 1>, scalar_prefetch = 0 : i64, scratch_operands = 0 : i64, tpu.core_type = #tpu.core_type<tc>, window_params = [{transform_indices = @transform_0, window_bounds = array<i64: 16, 32>}, {pipeline_mode = #tpu.pipeline_mode<synchronous>, transform_indices = @transform_1, window_bounds = array<i64: 1, 32>}, {transform_indices = @transform_2, window_bounds = array<i64: 16, 32>}]} {
    %c0 = arith.constant 0 : index
    %c0_0 = arith.constant 0 : index
    %0 = vector.load %arg1[%c0, %c0_0] : memref<16x32xf32, #tpu.memory_space<vmem>>, vector<16x32xf32>
    %1 = arith.mulf %0, %0 : vector<16x32xf32>
    %cst = arith.constant dense<0.000000e+00> : vector<16xf32>
    %2 = vector.multi_reduction <add>, %1, %cst [1] : vector<16x32xf32> to vector<16xf32>
    %3 = vector.shape_cast %2 : vector<16xf32> to vector<16x1xf32>
    %cst_1 = arith.constant 3.200000e+01 : f32
    %4 = vector.broadcast %cst_1 : f32 to vector<16x1xf32>
    %5 = arith.divf %3, %4 : vector<16x1xf32>
    %cst_2 = arith.constant 9.99999997E-7 : f32
    %6 = vector.broadcast %cst_2 : f32 to vector<16x1xf32>
    %7 = arith.addf %5, %6 : vector<16x1xf32>
    %8 = math.rsqrt %7 : vector<16x1xf32>
    %9 = vector.broadcast %8 : vector<16x1xf32> to vector<16x32xf32>
    %10 = arith.mulf %0, %9 : vector<16x32xf32>
    %c0_3 = arith.constant 0 : index
    %c0_4 = arith.constant 0 : index
    %11 = vector.load %arg2[%c0_3, %c0_4] : memref<1x32xf32, #tpu.memory_space<vmem>>, vector<1x32xf32>
    %12 = vector.broadcast %11 : vector<1x32xf32> to vector<16x32xf32>
    %13 = arith.mulf %10, %12 : vector<16x32xf32>
    %c0_5 = arith.constant 0 : index
    %c0_6 = arith.constant 0 : index
    %14 = vector.load %arg3[%c0_5, %c0_6] : memref<16x32xf32, #tpu.memory_space<vmem>>, vector<16x32xf32>
    tpu.vector_store %arg3[%c0_5, %c0_6], %13 {strides = array<i32>} : memref<16x32xf32, #tpu.memory_space<vmem>>, vector<16x32xf32>,
    return
  }
  func.func @transform_0(%arg0: i32) -> (i32, i32) {
    %c0_i32 = arith.constant 0 : i32
    %c0_i32_0 = arith.constant 0 : i32
    return %arg0, %c0_i32 : i32, i32
  }
  func.func @transform_1(%arg0: i32) -> (i32, i32) {
    %c0_i32 = arith.constant 0 : i32
    %c0_i32_0 = arith.constant 0 : i32
    %c0_i32_1 = arith.constant 0 : i32
    return %c0_i32, %c0_i32_0 : i32, i32
  }
  func.func @transform_2(%arg0: i32) -> (i32, i32) {
    %c0_i32 = arith.constant 0 : i32
    %c0_i32_0 = arith.constant 0 : i32
    return %arg0, %c0_i32 : i32, i32
  }
}

</mosaic_0001>

<llo_original>
// kernel: tpu_custom_call.1
$region0: #{tpu_custom_call.1}
  #allocation0 [shape = 'u32[]', space=smem, size = 0x4, offset = 0x4, fixed_abs, tag = 'smem constant byte address 0x4 - core index']
  #allocation1 [shape = 'u32[144,128]{1,0:T(1,128)}', space=vmem, size = 0x12000, scoped, tag = 'internal scratch']
  %s0 = inlined_call_operand.hbm [shape: f32[16,32], index: 0, kind: input, shape index: {}]
  %s1 = inlined_call_operand.vmem [shape: f32[1,32], index: 1, kind: input, shape index: {}]
  %s2 = inlined_call_operand.hbm [shape: f32[16,32], index: 2, kind: output, shape index: {}]
  %s3 = sld [smem:[#allocation0]]
  $region22: #{tpu_custom_call.1} parent=0
    _
  %s5 = ssub.s32 1, %s3
  %s6 = scalar_select 0, %s5, %s3
  $region1: #{tpu_custom_call.1} parent=0
    #allocation2 [shape = 'u8[8192]{0}', space=vmem, size = 0x2000, scoped, tag = 'input window, operand 0, single buffered']
    #allocation3 [shape = 's32[1]{0}', space=sflag, size = 0x4, scoped, tag = 'scoped memory for tpu_custom_call.1']
    #allocation4 [shape = 's32[1]{0}', space=sflag, size = 0x4, scoped, tag = 'scoped memory for tpu_custom_call.1']
    #allocation5 [shape = 'u8[8192]{0}', space=vmem, size = 0x2000, scoped, tag = 'output window, operand 0, single buffered']
    %7 = vsyncpa [#allocation3], 0
    %8 = vsyncpa [#allocation4], 0
    // Predicated region
    $region2: #{tpu_custom_call.1} parent=1 // pred_check
      _
    $region3: #{tpu_custom_call.1} parent=1 // pred_check_branch
      %10 = sbr.rel (0) target = $region5
    $region4: #{tpu_custom_call.1} parent=1 // pred_region
      %s12 = ssub.s32 256, 256
      %13 = vsyncadd [#allocation3], %s12
      %s14 = sshll.u32 [#allocation2], 4
      %s15 = int_to_ptr.vmem [resolvable:$true] %s14
      %20 = dma.hbm_to_vmem [thread:$0]  %s0, 256, %s15, [#allocation3], 128, 128, 8
    $region5: #{tpu_custom_call.1} parent=1 // pred_fallthru
      _
    // Predicated region
    $region6: #{tpu_custom_call.1} parent=1 // pred_check
      _
    $region7: #{tpu_custom_call.1} parent=1 // pred_check_branch
      %22 = sbr.rel (0) target = $region9
    $region8: #{tpu_custom_call.1} parent=1 // pred_region
      _
    $region9: #{tpu_custom_call.1} parent=1 // pred_fallthru
      _
    // Predicated region
    $region10: #{tpu_custom_call.1} parent=1 // pred_check
      _
    $region11: #{tpu_custom_call.1} parent=1 // pred_check_branch
      %24 = sbr.rel (0) target = $region13
    $region12: #{tpu_custom_call.1} parent=1 // pred_region
      %25 = dma.done [#allocation3], 256
    $region13: #{tpu_custom_call.1} parent=1 // pred_fallthru
      _
    %v26 = vld [vmem:[#allocation2] sm:$0xff]
    %v27 = vld [vmem:[#allocation2 + $0x8] sm:$0xff]
    %v28 = vmul.f32 %v26, %v26
    %v29 = vmul.f32 %v27, %v27
    %vm30 = vcmask 261120
    %v31 = vsel %vm30, %v28, 0.0
    %32 = vadd.xlane.f32.xlu0 %v31
    %v33 = vpop.xlane.xlu0 %32
    %v34 = vsel %vm30, %v29, 0.0
    %35 = vadd.xlane.f32.xlu0 %v34
    %v36 = vpop.xlane.xlu0 %35
    %v37 = vrcp.pop 32.0
    %v38 = vmul.f32 %v33, %v37
    %v39 = vmul.f32 %v36, %v37
    %v40 = vadd.f32 %v38, 1e-06
    %v41 = vadd.f32 %v39, 1e-06
    %v42 = vrsqrt.pop %v40
    %v43 = vrsqrt.pop %v41
    %v44 = vmul.f32 %v26, %v42
    %v45 = vmul.f32 %v27, %v43
    %v46 = vld [vmem:[%s1] sm:$0x1]
    %v48 = vlaneseq
    %v49 = vshrl.u32 %v48, 7
    %v50 = vsub.s32 0, %v49
    %v51 = vrot.slane %v46, %v50
    %v53 = vmul.f32 %v44, %v51
    %v54 = vmul.f32 %v45, %v51
    %55 = vst.msk [vmem:[#allocation5] sm:$0xff] %vm30, %v53
    %56 = vst.msk [vmem:[#allocation5 + $0x8] sm:$0xff] %vm30, %v54
    // Predicated region
    $region14: #{tpu_custom_call.1} parent=1 // pred_check
      _
    $region15: #{tpu_custom_call.1} parent=1 // pred_check_branch
      %58 = sbr.rel (0) target = $region17
    $region16: #{tpu_custom_call.1} parent=1 // pred_region
      %s60 = ssub.s32 256, 256
      %61 = vsyncadd [#allocation4], %s60
      %s62 = sshll.u32 [#allocation5], 4
      %s63 = int_to_ptr.vmem [resolvable:$true] %s62
      %68 = dma.vmem_to_hbm [thread:$0]  %s63, 256, %s2, [#allocation4], 128, 128, 8
    $region17: #{tpu_custom_call.1} parent=1 // pred_fallthru
      _
    // Predicated region
    $region18: #{tpu_custom_call.1} parent=1 // pred_check
      _
    $region19: #{tpu_custom_call.1} parent=1 // pred_check_branch
      %70 = sbr.rel (0) target = $region21
    $region20: #{tpu_custom_call.1} parent=1 // pred_region
      %71 = dma.done [#allocation4], 256
    $region21: #{tpu_custom_call.1} parent=1 // pred_fallthru
      _
    %72 = vsyncpa [#allocation3], 1
    %73 = vsyncpa [#allocation4], 1

</llo_original>
